<compile_context>
chip_gen: v6e
topology: v6e:2x2x1
jax: 0.10.0
libtpu: 0.0.40
codegen_flags: <defaults>
</compile_context>

<pallas_src>
import functools

import jax
import jax.numpy as jnp
from jax.experimental import pallas as pl
from jax.experimental.pallas import tpu as pltpu


def _round_up(x: int, m: int) -> int:
    return ((x + m - 1) // m) * m


def _patch_embed_kernel(x_ref, w_ref, b_ref, o_ref):
    # x_ref: (tm, C)  activations in their HBM dtype (e.g. f32); cast here so
    #        the wrapper never materializes an extra (M, C) copy in HBM.
    # w_ref: (C, E)   pre-transposed weight (bf16/f32), VMEM-resident.
    # b_ref: (1, E)   f32 bias, VMEM-resident.
    # o_ref: (tm, E)  output tile (out_dtype).
    x = x_ref[...].astype(w_ref.dtype)            # cheap VPU convert in VMEM
    acc = jnp.dot(x, w_ref[...],                  # native (m,k)x(k,n) on MXU
                  preferred_element_type=jnp.float32)
    acc = acc + b_ref[...]                        # f32 bias on the accumulator
    o_ref[...] = acc.astype(o_ref.dtype)


@functools.partial(jax.jit, static_argnames=("tm_max", "use_bf16", "out_dtype"))
def patch_embedding(x, weight, bias, *, tm_max: int = 1024,
                    use_bf16: bool = True, out_dtype=None):
    """x: (B, T, C); weight: (E, C) [torch nn.Linear layout]; bias: (E,).

    Returns (B, T, E) = x @ weight.T + bias.  When use_bf16=True the matmul
    runs bf16 x bf16 with f32 MXU accumulation (standard mixed precision).
    `out_dtype=None` keeps x.dtype; pass jnp.bfloat16 when the consumer
    tolerates it to halve output writeback traffic.
    """
    assert x.ndim == 3
    B, T, C = x.shape
    E = weight.shape[0]
    assert weight.shape == (E, C)
    assert bias.shape == (E,)

    out_dtype = x.dtype if out_dtype is None else jnp.dtype(out_dtype)
    M = B * T
    x2 = x.reshape(M, C)                      # no dtype copy, no pad copy

    compute_dtype = jnp.bfloat16 if use_bf16 else x.dtype
    # One-time, tiny (E*C) wrapper cost: transpose + cast the weight so the
    # kernel needs no per-step relayout.
    w = weight.T.astype(compute_dtype)        # (C, E)
    b2 = bias.reshape(1, E).astype(jnp.float32)

    x_itemsize = jnp.dtype(x.dtype).itemsize
    w_itemsize = jnp.dtype(compute_dtype).itemsize
    out_itemsize = jnp.dtype(out_dtype).itemsize

    def footprint(tm):
        # Conservative: double-buffered x/out tiles, worst-case 2 weight bufs.
        return (2 * tm * C * x_itemsize
                + 2 * tm * E * out_itemsize
                + 2 * C * E * w_itemsize
                + 2 * E * 4)

    # Row tile: multiple of 8 sublanes; aim for >= ~8 grid steps so the v7x
    # megacore actually shards (needs grid_m >= 2) and the DMA pipeline has
    # depth; never exceed the per-generation-safe VMEM budget.
    VMEM_BUDGET = 24 << 20
    tm = min(_round_up(tm_max, 8),
             max(8, _round_up(-(-M // 8), 8)),
             _round_up(M, 8))
    while tm > 8 and footprint(tm) > VMEM_BUDGET:
        tm = _round_up(tm // 2, 8)
    grid_m = -(-M // tm)                      # ragged tail -> masked edge block

    vmem_limit = int(min(64 << 20, max(footprint(tm) + (4 << 20), 16 << 20)))

    cost = pl.CostEstimate(
        flops=2 * M * C * E,
        transcendentals=0,
        bytes_accessed=(M * C * x_itemsize          # x (read once, in HBM dtype)
                        + C * E * w_itemsize        # weight
                        + E * 4                     # bias
                        + M * E * out_itemsize),    # output
    )

    # TODO(synk): for odd patch/channel configs (C or E not a multiple of 128
    # lanes, e.g. C = 3*14*14 = 588) zero-pad the weight to a lane-dense shape
    # once wrapper-side; standard ViT sizes (768/1024) are already aligned.
    out = pl.pallas_call(
        _patch_embed_kernel,
        out_shape=jax.ShapeDtypeStruct((M, E), out_dtype),
        grid_spec=pltpu.PrefetchScalarGridSpec(
            num_scalar_prefetch=0,
            grid=(grid_m,),
            in_specs=[
                pl.BlockSpec((tm, C), lambda i: (i, 0)),   # streamed row tiles
                pl.BlockSpec((C, E), lambda i: (0, 0)),    # weight, resident
                pl.BlockSpec((1, E), lambda i: (0, 0)),    # bias, resident
            ],
            out_specs=pl.BlockSpec((tm, E), lambda i: (i, 0)),
        ),
        compiler_params=pltpu.CompilerParams(
            dimension_semantics=("parallel",),   # no cross-step state
            vmem_limit_bytes=vmem_limit,
        ),
        cost_estimate=cost,
    )(x2, w, b2)

    return out.reshape(B, T, E)


if __name__ == "__main__":
    # Small shapes consistent with the forward: (B, T, C) -> (B, T, E)
    B, T, C, E = 2, 8, 4, 32

    key = jax.random.PRNGKey(0)
    kx, kw, kb = jax.random.split(key, 3)

    x = jax.random.normal(kx, (B, T, C), dtype=jnp.float32)
    # Deterministic synthetic parameters (shapes match nn.Linear(C, E)):
    weight = jax.random.normal(kw, (E, C), dtype=jnp.float32) * 0.02
    bias = jax.random.normal(kb, (E,), dtype=jnp.float32) * 0.02

    y = patch_embedding(x, weight, bias)
    y = jax.block_until_ready(y)

    # Reference in plain JAX (bf16 matmul + f32 accumulate -> loosened tol).
    y_ref = x @ weight.T + bias
    assert y.shape == (B, T, E)
    assert y.dtype == x.dtype
    assert jnp.allclose(y, y_ref, atol=1e-2, rtol=1e-2)

    # Exercise the bf16-output knob once (consumer-tolerant path).
    y_bf16 = jax.block_until_ready(
        patch_embedding(x, weight, bias, out_dtype=jnp.bfloat16))
    assert y_bf16.dtype == jnp.bfloat16
    assert jnp.allclose(y_bf16.astype(jnp.float32), y_ref, atol=3e-2, rtol=3e-2)

    print("KERNEL_OK")
</pallas_src>

<mosaic_0001>
module attributes {stable_mosaic.version = 11 : i64} {
  func.func @_patch_embed_kernel(%arg0: i32, %arg1: memref<8x4xf32, #tpu.memory_space<vmem>>, %arg2: memref<4x32xbf16, #tpu.memory_space<vmem>>, %arg3: memref<1x32xf32, #tpu.memory_space<vmem>>, %arg4: memref<8x32xf32, #tpu.memory_space<vmem>>) attributes {dimension_semantics = [#tpu.dimension_semantics<parallel>], iteration_bounds = array<i64: 2>, scalar_prefetch = 0 : i64, scratch_operands = 0 : i64, tpu.core_type = #tpu.core_type<tc>, window_params = [{transform_indices = @transform_0, window_bounds = array<i64: 8, 4>}, {pipeline_mode = #tpu.pipeline_mode<synchronous>, transform_indices = @transform_1, window_bounds = array<i64: 4, 32>}, {pipeline_mode = #tpu.pipeline_mode<synchronous>, transform_indices = @transform_2, window_bounds = array<i64: 1, 32>}, {transform_indices = @transform_3, window_bounds = array<i64: 8, 32>}]} {
    %c0 = arith.constant 0 : index
    %c0_0 = arith.constant 0 : index
    %0 = vector.load %arg1[%c0, %c0_0] : memref<8x4xf32, #tpu.memory_space<vmem>>, vector<8x4xf32>
    %1 = arith.truncf %0 : vector<8x4xf32> to vector<8x4xbf16>
    %c0_1 = arith.constant 0 : index
    %c0_2 = arith.constant 0 : index
    %2 = vector.load %arg2[%c0_1, %c0_2] : memref<4x32xbf16, #tpu.memory_space<vmem>>, vector<4x32xbf16>
    %cst = arith.constant dense<0.000000e+00> : vector<8x32xf32>
    %3 = tpu.matmul %1, %2, %cst {dimension_numbers = #tpu.dot_dimension_numbers<[1], [0], [0], [1], [0, 0, 1, 1], [], []>} : vector<8x4xbf16>, vector<4x32xbf16>, vector<8x32xf32> -> vector<8x32xf32>
    %c0_3 = arith.constant 0 : index
    %c0_4 = arith.constant 0 : index
    %4 = vector.load %arg3[%c0_3, %c0_4] : memref<1x32xf32, #tpu.memory_space<vmem>>, vector<1x32xf32>
    %5 = vector.broadcast %4 : vector<1x32xf32> to vector<8x32xf32>
    %6 = arith.addf %3, %5 : vector<8x32xf32>
    %c0_5 = arith.constant 0 : index
    %c0_6 = arith.constant 0 : index
    %7 = vector.load %arg4[%c0_5, %c0_6] : memref<8x32xf32, #tpu.memory_space<vmem>>, vector<8x32xf32>
    tpu.vector_store %arg4[%c0_5, %c0_6], %6 {strides = array<i32>} : memref<8x32xf32, #tpu.memory_space<vmem>>, vector<8x32xf32>,
    return
  }
  func.func @transform_0(%arg0: i32) -> (i32, i32) {
    %c0_i32 = arith.constant 0 : i32
    %c0_i32_0 = arith.constant 0 : i32
    return %arg0, %c0_i32 : i32, i32
  }
  func.func @transform_1(%arg0: i32) -> (i32, i32) {
    %c0_i32 = arith.constant 0 : i32
    %c0_i32_0 = arith.constant 0 : i32
    %c0_i32_1 = arith.constant 0 : i32
    return %c0_i32, %c0_i32_0 : i32, i32
  }
  func.func @transform_2(%arg0: i32) -> (i32, i32) {
    %c0_i32 = arith.constant 0 : i32
    %c0_i32_0 = arith.constant 0 : i32
    %c0_i32_1 = arith.constant 0 : i32
    return %c0_i32, %c0_i32_0 : i32, i32
  }
  func.func @transform_3(%arg0: i32) -> (i32, i32) {
    %c0_i32 = arith.constant 0 : i32
    %c0_i32_0 = arith.constant 0 : i32
    return %arg0, %c0_i32 : i32, i32
  }
}

</mosaic_0001>

<llo_original>
// kernel: patch_embedding.1
$region0: #{patch_embedding.1}
  #allocation0 [shape = 'u32[]', space=smem, size = 0x4, offset = 0x4, fixed_abs, tag = 'smem constant byte address 0x4 - core index']
  #allocation1 [shape = 'u32[144,128]{1,0:T(1,128)}', space=vmem, size = 0x12000, scoped, tag = 'internal scratch']
  %s0 = inlined_call_operand.vmem [shape: f32[16,4], index: 0, kind: input, shape index: {}]
  %s1 = inlined_call_operand.vmem [shape: bf16[4,32], index: 1, kind: input, shape index: {}]
  %s2 = inlined_call_operand.vmem [shape: f32[1,32], index: 2, kind: input, shape index: {}]
  %s3 = inlined_call_operand.hbm [shape: f32[16,32], index: 3, kind: output, shape index: {}]
  %s4 = sld [smem:[#allocation0]]
  $region45: #{patch_embedding.1} parent=0
    _
  %s6 = ssub.s32 1, %s4
  %s7 = scalar_select 0, %s6, %s4
  $region1: #{patch_embedding.1} parent=0
    #allocation2 [shape = 'u8[8192]{0}', space=vmem, size = 0x2000, scoped, tag = 'output window, operand 0']
    #allocation3 [shape = 's32[2]{0}', space=sflag, size = 0x8, scoped, tag = 'scoped memory for patch_embedding.1']
    %8 = vsyncpa [#allocation3], 0
    %s9 = scalar_lea.sflag [#allocation3], 1
    %10 = vsyncpa %s9, 0
    loop: start=0, step=1, limit=4
    $region2: #{patch_embedding.1} parent=1 // loop_pre_header
      _
    $region3: #{patch_embedding.1} parent=1 // loop_header
      %s12 = sphi 0, %s16
      %p13 = scmp.ge.s32.totalorder %s12, 4
      %s22 = sphi 0, %s24
      %s25 = sphi 0, %s22
      %s26 = sphi 0, %s25
      %s42 = sphi 0, %s26
      %s46 = sphi 0, %s46
      %s48 = sphi 0, %s46
      %s49 = sphi 0, %s48
      %s63 = sphi 0, %s49
      %s67 = sphi 0, %s67
      %s69 = sphi 0, %s67
      %s70 = sphi 0, %s69
      %s84 = sphi 0, %s70
      %s90 = sphi 0, %s92
      %s93 = sphi 0, %s90
      %s94 = sphi 0, %s93
      %s110 = sphi 0, %s94
    $region4: #{patch_embedding.1} parent=1 // loop_header_branch
      %15 = sbr.rel (%p13) target = $region8
    $region5: #{patch_embedding.1} parent=1 // loop_body
      %s17 = ssub.s32 %s12, 1
      %s18 = ssub.s32 %s12, 2
      %s19 = sadd.s32 %s12, 1
      %s20 = ssub.s32 %s12, %s19
      %p21 = scmp.eq.s32.totalorder %s20, 0
      %s23 = sadd.s32 %s22, 1
      %s24 = scalar_select %p21, %s22, %s23
      %p27 = pneg %p21
      %p28 = scmp.eq.s32.totalorder %s12, 1
      %p29 = por %p27, %p28
      %p30 = scmp.ne.s32.totalorder %s22, %s25
      %p31 = scmp.eq.s32.totalorder %s12, 0
      %p32 = por %p30, %p31
      %p33 = scmp.ne.s32.totalorder %s22, %s25
      %p34 = scmp.eq.s32.totalorder %s17, 1
      %p35 = por %p33, %p34
      %p36 = scmp.ne.s32.totalorder %s25, %s26
      %p37 = scmp.eq.s32.totalorder %s17, 0
      %p38 = por %p36, %p37
      %p39 = scmp.ne.s32.totalorder %s25, %s26
      %p40 = scmp.eq.s32.totalorder %s18, 1
      %p41 = por %p39, %p40
      %p43 = scmp.ne.s32.totalorder %s26, %s42
      %p44 = scmp.eq.s32.totalorder %s18, 0
      %p45 = por %p43, %p44
      %s47 = sadd.s32 %s46, 1
      %p50 = scmp.eq.s32.totalorder %s12, 1
      %p51 = scmp.ne.s32.totalorder %s46, %s48
      %p52 = scmp.eq.s32.totalorder %s12, 0
      %p53 = por %p51, %p52
      %p54 = scmp.ne.s32.totalorder %s46, %s48
      %p55 = scmp.eq.s32.totalorder %s17, 1
      %p56 = por %p54, %p55
      %p57 = scmp.ne.s32.totalorder %s48, %s49
      %p58 = scmp.eq.s32.totalorder %s17, 0
      %p59 = por %p57, %p58
      %p60 = scmp.ne.s32.totalorder %s48, %s49
      %p61 = scmp.eq.s32.totalorder %s18, 1
      %p62 = por %p60, %p61
      %p64 = scmp.ne.s32.totalorder %s49, %s63
      %p65 = scmp.eq.s32.totalorder %s18, 0
      %p66 = por %p64, %p65
      %s68 = sadd.s32 %s67, 1
      %p71 = scmp.eq.s32.totalorder %s12, 1
      %p72 = scmp.ne.s32.totalorder %s67, %s69
      %p73 = scmp.eq.s32.totalorder %s12, 0
      %p74 = por %p72, %p73
      %p75 = scmp.ne.s32.totalorder %s67, %s69
      %p76 = scmp.eq.s32.totalorder %s17, 1
      %p77 = por %p75, %p76
      %p78 = scmp.ne.s32.totalorder %s69, %s70
      %p79 = scmp.eq.s32.totalorder %s17, 0
      %p80 = por %p78, %p79
      %p81 = scmp.ne.s32.totalorder %s69, %s70
      %p82 = scmp.eq.s32.totalorder %s18, 1
      %p83 = por %p81, %p82
      %p85 = scmp.ne.s32.totalorder %s70, %s84
      %p86 = scmp.eq.s32.totalorder %s18, 0
      %p87 = por %p85, %p86
      %s88 = ssub.s32 %s12, %s19
      %p89 = scmp.eq.s32.totalorder %s88, 0
      %s91 = sadd.s32 %s90, 1
      %s92 = scalar_select %p89, %s90, %s91
      %p95 = pneg %p89
      %p96 = scmp.eq.s32.totalorder %s12, 1
      %p97 = por %p95, %p96
      %p98 = scmp.ne.s32.totalorder %s90, %s93
      %p99 = scmp.eq.s32.totalorder %s12, 0
      %p100 = por %p98, %p99
      %p101 = scmp.ne.s32.totalorder %s90, %s93
      %p102 = scmp.eq.s32.totalorder %s17, 1
      %p103 = por %p101, %p102
      %p104 = scmp.ne.s32.totalorder %s93, %s94
      %p105 = scmp.eq.s32.totalorder %s17, 0
      %p106 = por %p104, %p105
      %p107 = scmp.ne.s32.totalorder %s93, %s94
      %p108 = scmp.eq.s32.totalorder %s18, 1
      %p109 = por %p107, %p108
      %p111 = scmp.ne.s32.totalorder %s94, %s110
      %p112 = scmp.eq.s32.totalorder %s18, 0
      %p113 = por %p111, %p112
      %p114 = scmp.le.s32.totalorder 1, %s12
      %p115 = scmp.lt.s32.totalorder %s12, 3
      %p116 = pnand %p114, %p115
      %p117 = pneg %p116
      // Predicated region
      $region9: #{patch_embedding.1} parent=5 // pred_check
        _
      $region10: #{patch_embedding.1} parent=5 // pred_check_branch
        %119 = sbr.rel (%p116) target = $region12
      $region11: #{patch_embedding.1} parent=5 // pred_region
        %s120 = ssub.s32 %s12, 1
        // Predicated region
        $region13: #{patch_embedding.1} parent=11 // pred_check
          %p121 = pneg %p59
        $region14: #{patch_embedding.1} parent=11 // pred_check_branch
          %123 = sbr.rel (%p121) target = $region16
        $region15: #{patch_embedding.1} parent=11 // pred_region
          _
        $region16: #{patch_embedding.1} parent=11 // pred_fallthru
          _
        // Predicated region
        $region17: #{patch_embedding.1} parent=11 // pred_check
          %p124 = pneg %p80
        $region18: #{patch_embedding.1} parent=11 // pred_check_branch
          %126 = sbr.rel (%p124) target = $region20
        $region19: #{patch_embedding.1} parent=11 // pred_region
          _
        $region20: #{patch_embedding.1} parent=11 // pred_fallthru
          _
      $region12: #{patch_embedding.1} parent=5 // pred_fallthru
        _
      %p127 = scmp.lt.s32.totalorder %s12, 2
      // Predicated region
      $region21: #{patch_embedding.1} parent=5 // pred_check
        %p128 = pneg %p127
      $region22: #{patch_embedding.1} parent=5 // pred_check_branch
        %130 = sbr.rel (%p128) target = $region24
      $region23: #{patch_embedding.1} parent=5 // pred_region
        // Predicated region
        $region25: #{patch_embedding.1} parent=23 // pred_check
          %p131 = pneg %p32
        $region26: #{patch_embedding.1} parent=23 // pred_check_branch
          %133 = sbr.rel (%p131) target = $region28
        $region27: #{patch_embedding.1} parent=23 // pred_region
          %p134 = scmp.lt.s32.totalorder %s12, 1
          %s135 = scalar_select %p134, %s12, 1
          %s136 = smul.addr %s135, 8
          %s137 = scalar_lea.vmem %s0, %s136
        $region28: #{patch_embedding.1} parent=23 // pred_fallthru
          _
      $region24: #{patch_embedding.1} parent=5 // pred_fallthru
        _
      %p138 = scmp.le.s32.totalorder 1, %s12
      %p139 = scmp.lt.s32.totalorder %s12, 3
      %p140 = pnand %p138, %p139
      %p141 = pneg %p140
      // Predicated region
      $region29: #{patch_embedding.1} parent=5 // pred_check
        _
      $region30: #{patch_embedding.1} parent=5 // pred_check_branch
        %143 = sbr.rel (%p140) target = $region32
      $region31: #{patch_embedding.1} parent=5 // pred_region
        %s144 = ssub.s32 %s12, 1
        %p145 = scmp.lt.s32.totalorder %s17, 1
        %s146 = scalar_select %p145, %s17, 1
        %s147 = smul.addr %s146, 8
        %s148 = scalar_lea.vmem %s0, %s147
        %p149 = pneg %p38
        %p150 = pneg %p35
        %p151 = pneg %p59
        %p152 = pneg %p56
        %p153 = pneg %p80
        %p154 = pneg %p77
        %p155 = pneg %p106
        %p156 = pneg %p103
        %s157 = sand.u32 %s93, 1
        %s158 = scalar_lea.sflag [#allocation3], %s157
        %s159 = sand.u32 %s93, 1
        %s160 = smul.addr %s159, 8
        %s161 = scalar_lea.vmem [#allocation2], %s160
        %p162 = scmp.lt.s32.totalorder %s17, 1
        %s163 = scalar_select %p162, %s17, 1
        %s164 = smul.addr %s163, 8
        %s165 = scalar_lea.vmem %s0, %s164
        %v167 = vld [vmem:[%s165] sm:$0xff]
        %v168 = vpack.c.bf16 %v167, %v167
        %v169 = vld [vmem:[%s1] sm:$0x3]
        %v170 = vld [vmem:[%s2] sm:$0x1]
        %v172 = vlaneseq
        %v173 = vshrl.u32 %v172, 7
        %v174 = vsub.s32 0, %v173
        %v175 = vrot.slane %v170, %v174
        %vm177 = vcmask 31744
        %v179 = vsel %vm177, %v168, 0
        %vm181 = vcmask 1041408
        %v183 = vsel %vm181, %v169, 0
        %185 = vmatprep.subr.bf16.mxu0 0
        %186 = vmatpush1.bf16.msra.mxu0 0
        %187 = vmatprep.subr.bf16.mxu0 0
        %188 = vmatpush1.bf16.msra.mxu0 0
        %189 = vmatprep.subr.bf16.mxu0 0
        %190 = vmatpush1.bf16.msra.mxu0 0
        %191 = vmatprep.subr.bf16.mxu0 0
        %192 = vmatpush1.bf16.msra.mxu0 0
        %193 = vmatprep.subr.bf16.mxu0 0
        %194 = vmatpush1.bf16.msra.mxu0 0
        %195 = vmatprep.subr.bf16.mxu0 0
        %196 = vmatpush1.bf16.msra.mxu0 0
        %197 = vmatprep.subr.bf16.mxu0 0
        %198 = vmatpush1.bf16.msra.mxu0 0
        %199 = vmatprep.subr.bf16.mxu0 0
        %200 = vmatpush1.bf16.msra.mxu0 %v183
        %201 = vmatprep.subr.bf16.mxu0 0
        %202 = vmatpush2.bf16.msra.mxu0 0
        %203 = vmatprep.subr.bf16.mxu0 0
        %204 = vmatpush2.bf16.msra.mxu0 0
        %205 = vmatprep.subr.bf16.mxu0 0
        %206 = vmatpush2.bf16.msra.mxu0 0
        %207 = vmatprep.subr.bf16.mxu0 0
        %208 = vmatpush2.bf16.msra.mxu0 0
        %209 = vmatprep.subr.bf16.mxu0 0
        %210 = vmatpush2.bf16.msra.mxu0 0
        %211 = vmatprep.subr.bf16.mxu0 0
        %212 = vmatpush2.bf16.msra.mxu0 0
        %213 = vmatprep.subr.bf16.mxu0 0
        %214 = vmatpush2.bf16.msra.mxu0 0
        %215 = vmatprep.subr.bf16.mxu0 0
        %216 = vmatpush2.bf16.msra.mxu0 0
        %217 = vmatprep.mubr.bf16.mxu0 0
        %218 = vmatmul.mubr.bf16.gmra.mxu0 %v179
        %v219 = vpop.f32.mrf.mxu0
        %v220 = vadd.f32 %v175, %v219
        %v221 = vpop.f32.mrf.mxu0
        %v222 = vpop.f32.mrf.mxu0
        %v223 = vpop.f32.mrf.mxu0
        %224 = vdwg.mxu0
        %vm225 = vcmask 261120
        %226 = vst.msk [vmem:[%s161] sm:$0xff] %vm225, %v220
        %s227 = sand.u32 %s93, 1
        %s228 = scalar_lea.sflag [#allocation3], %s227
        %s229 = sand.u32 %s93, 1
        %s230 = smul.addr %s229, 8
        %s231 = scalar_lea.vmem [#allocation2], %s230
        // Predicated region
        $region33: #{patch_embedding.1} parent=31 // pred_check
          %p232 = pneg %p103
        $region34: #{patch_embedding.1} parent=31 // pred_check_branch
          %234 = sbr.rel (%p232) target = $region36
        $region35: #{patch_embedding.1} parent=31 // pred_region
          %s236 = ssub.s32 128, 128
          %237 = vsyncadd %s228, %s236
          %s238 = smul.addr %s17, 128
          %s239 = scalar_lea.hbm %s3, %s238
          %s241 = sshll.u32 %s231, 4
          %s242 = int_to_ptr.vmem [resolvable:$true] %s241
          %244 = dma.vmem_to_hbm [thread:$0]  %s242, 128, %s239, %s228
        $region36: #{patch_embedding.1} parent=31 // pred_fallthru
          _
      $region32: #{patch_embedding.1} parent=5 // pred_fallthru
        _
      %p245 = scmp.le.s32.totalorder 2, %s12
      // Predicated region
      $region37: #{patch_embedding.1} parent=5 // pred_check
        %p246 = pneg %p245
      $region38: #{patch_embedding.1} parent=5 // pred_check_branch
        %248 = sbr.rel (%p246) target = $region40
      $region39: #{patch_embedding.1} parent=5 // pred_region
        %s249 = ssub.s32 %s12, 2
        // Predicated region
        $region41: #{patch_embedding.1} parent=39 // pred_check
          %p250 = pneg %p109
        $region42: #{patch_embedding.1} parent=39 // pred_check_branch
          %252 = sbr.rel (%p250) target = $region44
        $region43: #{patch_embedding.1} parent=39 // pred_region
          %s253 = sand.u32 %s94, 1
          %s254 = scalar_lea.sflag [#allocation3], %s253
          %s255 = sand.u32 %s94, 1
          %s256 = smul.addr %s255, 8
          %s257 = scalar_lea.vmem [#allocation2], %s256
          %258 = dma.done %s254, 128
        $region44: #{patch_embedding.1} parent=39 // pred_fallthru
          _
      $region40: #{patch_embedding.1} parent=5 // pred_fallthru
        _
    $region6: #{patch_embedding.1} parent=1 // loop_footer
      %s16 = sadd.s32 1, %s12
    $region7: #{patch_embedding.1} parent=1 // loop_footer_branch
      %11 = sbr.rel target = $region3
    $region8: #{patch_embedding.1} parent=1 // loop_exit
      _
    %259 = vsyncpa [#allocation3], 1
    %s260 = scalar_lea.sflag [#allocation3], 1
    %261 = vsyncpa %s260, 1

</llo_original>
